<compile_context>
chip_gen: v6e
topology: v6e:2x2x1
jax: 0.10.0
libtpu: 0.0.40
codegen_flags: <defaults>
</compile_context>

<pallas_src>
import jax
import jax.numpy as jnp
from jax import lax
from jax.experimental import pallas as pl
from jax.experimental.pallas import tpu as pltpu


def _round_up(x: int, m: int) -> int:
    return ((x + m - 1) // m) * m


def _round_down_128(x: int) -> int:
    return max(128, (x // 128) * 128)


def _vmem_capacity_bytes() -> int:
    try:
        info = pltpu.get_tpu_info()
        cap = int(getattr(info, "vmem_capacity_bytes", 0))
        if cap > 0:
            return cap
    except Exception:
        pass
    return 64 * 1024 * 1024  # conservative fallback: v7x per-TensorCore VMEM


def _phase2_vmem_bytes(tm, tk, n_sup, fout_p, adj_bytes, s_bytes, out_bytes,
                       resident, use_acc):
    b = 2 * tm * tk * adj_bytes                           # adj double buffer
    if resident:
        b += 2 * n_sup * fout_p * s_bytes                 # resident support
    else:
        b += 2 * tk * fout_p * s_bytes                    # streamed support tiles
    b += 2 * tm * fout_p * out_bytes                      # output block
    b += 2 * 8 * fout_p * 4                               # bias (sublane padded)
    if use_acc:
        b += tm * fout_p * 4                              # f32 accumulator scratch
    return b


def _select_phase2_tiles(n, fout_p, adj_bytes, s_bytes, out_bytes, use_acc,
                         tile_rows, tile_k, vmem_budget, force_resident):
    """Pick (tm, tk, resident_support).  Tiles are multiples of 128 and never
    hostage to N's factorization (remainder handled by cdiv grid + masking)."""
    n128 = _round_up(n, 128)
    tm = min(_round_down_128(tile_rows), n128)
    # Megacore occupancy (v7x has 2 TensorCores): keep >= 2 row tiles if N allows.
    if n128 >= 256 and tm >= n128:
        tm = _round_up(n128 // 2, 128)
    tk = min(_round_down_128(tile_k), n128)

    def fits(tm_, tk_, res_):
        return _phase2_vmem_bytes(tm_, tk_, _round_up(n, tk_), fout_p,
                                  adj_bytes, s_bytes, out_bytes, res_,
                                  use_acc) <= vmem_budget

    if force_resident is None:
        resident = fits(tm, tk, True)
    else:
        resident = bool(force_resident)

    while not fits(tm, tk, resident) and (tm > 128 or tk > 128):
        if tk >= tm and tk > 128:
            tk = _round_down_128(tk // 2)
        else:
            tm = _round_down_128(tm // 2)
        if force_resident is None:
            resident = fits(tm, tk, True)
    return tm, tk, resident


# ---------------------------------------------------------------------------
# Kernel 1: support = x @ weight  (row-tiled; x/weight are small, so the
# (Fin, Fout) weight block is kept resident).
# ---------------------------------------------------------------------------
def _support_kernel(x_ref, w_ref, s_ref):
    s_ref[...] = jnp.dot(
        x_ref[...], w_ref[...], preferred_element_type=jnp.float32
    ).astype(s_ref.dtype)


# ---------------------------------------------------------------------------
# Kernel 2: out = adj @ support + bias  (2-D grid, accumulated over k)
# ---------------------------------------------------------------------------
def _make_aggregate_kernel(n, tm, tk, fout_p, resident_support,
                           accumulate_in_out, needs_col_mask):
    def kernel(adj_ref, s_ref, b_ref, o_ref, *scratch):
        k = pl.program_id(1)

        adj_blk = adj_ref[...]
        if needs_col_mask:
            # The last reduction tile overhangs adj's (unpadded) columns; zero
            # them with a select so stale/NaN VMEM contents cannot leak.
            col = lax.broadcasted_iota(jnp.int32, (tm, tk), 1)
            adj_blk = jnp.where(col < (n - k * tk), adj_blk,
                                jnp.zeros_like(adj_blk))

        if resident_support:
            row0 = pl.multiple_of(k * tk, 128)
            s_blk = s_ref[pl.ds(row0, tk), :]
        else:
            s_blk = s_ref[...]

        contrib = jnp.dot(adj_blk, s_blk, preferred_element_type=jnp.float32)

        acc_ref = o_ref if accumulate_in_out else scratch[0]

        @pl.when(k == 0)
        def _init():
            # Bias is the initial value of the accumulator -> added exactly
            # once, in f32.
            acc_ref[...] = jnp.broadcast_to(b_ref[...], (tm, fout_p))

        acc_ref[...] += contrib

        if not accumulate_in_out:
            @pl.when(k == pl.num_programs(1) - 1)
            def _finalize():
                o_ref[...] = acc_ref[...].astype(o_ref.dtype)

    return kernel


def graph_convolution(x, adj, weight, bias=None, *, compute_dtype=None,
                      tile_rows=512, tile_k=1024, resident_support=None):
    """Pallas GCN forward.  x:[N,Fin], adj:[N,N], weight:[Fin,Fout], bias:[Fout].

    `adj` is used exactly as stored (no padding / dtype copy is materialized).
    `compute_dtype` controls the x/weight/support dtype only.
    """
    n, fin = x.shape
    assert adj.shape == (n, n)
    fout = weight.shape[1]

    if compute_dtype is None:
        compute_dtype = x.dtype
    compute_dtype = jnp.dtype(compute_dtype)
    adj_dtype = jnp.dtype(adj.dtype)
    out_dtype = jnp.promote_types(compute_dtype, adj_dtype)
    if bias is None:
        bias = jnp.zeros((fout,), jnp.float32)

    fin_p = _round_up(fin, 128)
    fout_p = _round_up(fout, 128)

    adj_bytes = adj_dtype.itemsize
    s_bytes = compute_dtype.itemsize
    out_bytes = jnp.dtype(out_dtype).itemsize
    accumulate_in_out = (jnp.dtype(out_dtype) == jnp.dtype(jnp.float32))

    vmem_cap = _vmem_capacity_bytes()
    vmem_budget = min(int(vmem_cap * 0.6), 96 * 1024 * 1024)

    tm, tk, resident = _select_phase2_tiles(
        n, fout_p, adj_bytes, s_bytes, out_bytes,
        use_acc=not accumulate_in_out,
        tile_rows=tile_rows, tile_k=tile_k,
        vmem_budget=vmem_budget, force_resident=resident_support)

    n_rows_p = _round_up(n, tm)   # padded output rows (sliced off at the end)
    n_sup = _round_up(n, tk)      # padded support rows (zero rows -> zero contribution)
    grid_rows = n_rows_p // tm
    grid_k = n_sup // tk
    needs_col_mask = (n % tk) != 0

    # --- Phase 1: support = x @ weight (x / weight / bias are tiny: pad + cast) ---
    x_p = jnp.pad(x, ((0, n_sup - n), (0, fin_p - fin))).astype(compute_dtype)
    w_p = jnp.pad(weight, ((0, fin_p - fin), (0, fout_p - fout))).astype(compute_dtype)
    b_p = jnp.pad(bias.astype(jnp.float32), (0, fout_p - fout)).reshape(1, fout_p)

    tq = tk  # divides n_sup by construction
    p1_need = (2 * tq * fin_p * s_bytes + 2 * fin_p * fout_p * s_bytes
               + 2 * tq * fout_p * s_bytes)
    p1_limit = min(int(vmem_cap * 0.9),
                   max(p1_need + 8 * 1024 * 1024, 32 * 1024 * 1024))
    p1_cost = pl.CostEstimate(
        flops=2 * n_sup * fin_p * fout_p, transcendentals=0,
        bytes_accessed=(n_sup * fin_p + fin_p * fout_p + n_sup * fout_p) * s_bytes)
    # TODO(synk): tile Fin/Fout in phase 1 if feature dims ever grow so large
    # that the resident weight block no longer fits VMEM.
    support = pl.pallas_call(
        _support_kernel,
        out_shape=jax.ShapeDtypeStruct((n_sup, fout_p), compute_dtype),
        grid_spec=pltpu.PrefetchScalarGridSpec(
            num_scalar_prefetch=0,
            grid=(n_sup // tq,),
            in_specs=[
                pl.BlockSpec((tq, fin_p), lambda i: (i, 0)),
                pl.BlockSpec((fin_p, fout_p), lambda i: (0, 0)),
            ],
            out_specs=pl.BlockSpec((tq, fout_p), lambda i: (i, 0)),
        ),
        compiler_params=pltpu.CompilerParams(
            dimension_semantics=("parallel",),
            vmem_limit_bytes=p1_limit,
        ),
        cost_estimate=p1_cost,
    )(x_p, w_p)

    # --- Phase 2: out = adj @ support + bias (adj streamed as-is from HBM) ---
    if resident:
        s_spec = pl.BlockSpec((n_sup, fout_p), lambda i, k: (0, 0))
    else:
        s_spec = pl.BlockSpec((tk, fout_p), lambda i, k: (k, 0))

    scratch_shapes = []
    if not accumulate_in_out:
        scratch_shapes.append(pltpu.VMEM((tm, fout_p), jnp.float32))

    p2_need = _phase2_vmem_bytes(tm, tk, n_sup, fout_p, adj_bytes, s_bytes,
                                 out_bytes, resident, not accumulate_in_out)
    p2_limit = min(int(vmem_cap * 0.9),
                   max(p2_need + 8 * 1024 * 1024, 32 * 1024 * 1024))
    p2_cost = pl.CostEstimate(
        flops=2 * grid_rows * tm * n_sup * fout_p,
        transcendentals=0,
        bytes_accessed=(n * n * adj_bytes
                        + (n_sup * fout_p * s_bytes if resident
                           else grid_rows * n_sup * fout_p * s_bytes)
                        + n_rows_p * fout_p * out_bytes),
    )

    kernel = _make_aggregate_kernel(n, tm, tk, fout_p, resident,
                                    accumulate_in_out, needs_col_mask)

    out_p = pl.pallas_call(
        kernel,
        out_shape=jax.ShapeDtypeStruct((n_rows_p, fout_p), out_dtype),
        grid_spec=pltpu.PrefetchScalarGridSpec(
            num_scalar_prefetch=0,
            grid=(grid_rows, grid_k),
            in_specs=[
                pl.BlockSpec((tm, tk), lambda i, k: (i, k)),     # adj (no host copy)
                s_spec,                                           # support
                pl.BlockSpec((1, fout_p), lambda i, k: (0, 0)),   # bias (resident)
            ],
            out_specs=pl.BlockSpec((tm, fout_p), lambda i, k: (i, 0)),
            scratch_shapes=scratch_shapes,
        ),
        compiler_params=pltpu.CompilerParams(
            dimension_semantics=("parallel", "arbitrary"),
            vmem_limit_bytes=p2_limit,
        ),
        cost_estimate=p2_cost,
    )(adj, support, b_p)

    return out_p[:n, :fout]


if __name__ == "__main__":
    key = jax.random.PRNGKey(0)
    k_x, k_adj, k_w, k_b, k_x2, k_adj2, k_w2, k_b2 = jax.random.split(key, 8)

    def make_problem(kx, kadj, kw, kb, n, fin, fout):
        # Parameter init mirrors reset_parameters(): uniform(-stdv, stdv),
        # stdv = 1/sqrt(out_features).
        stdv = 1.0 / jnp.sqrt(jnp.float32(fout))
        w = jax.random.uniform(kw, (fin, fout), minval=-stdv, maxval=stdv,
                               dtype=jnp.float32)
        b = jax.random.uniform(kb, (fout,), minval=-stdv, maxval=stdv,
                               dtype=jnp.float32)
        x = jax.random.normal(kx, (n, fin), dtype=jnp.float32)
        adj = (jax.random.uniform(kadj, (n, n)) > 0.5).astype(jnp.float32)
        adj = adj + jnp.eye(n, dtype=jnp.float32)
        adj = adj / jnp.sum(adj, axis=1, keepdims=True)
        return x, adj, w, b

    def reference(x, adj, w, b):
        return (jnp.dot(adj, jnp.dot(x, w, precision=lax.Precision.HIGHEST),
                        precision=lax.Precision.HIGHEST) + b)

    # Case 1: 128-aligned N, f32, resident support, accumulate-in-output path.
    x, adj, w, b = make_problem(k_x, k_adj, k_w, k_b, 512, 64, 48)
    ref = reference(x, adj, w, b)
    out = jax.block_until_ready(graph_convolution(x, adj, w, b))
    assert out.shape == (512, 48)
    assert jnp.allclose(out, ref, atol=2e-4, rtol=2e-4), float(
        jnp.max(jnp.abs(out - ref)))

    # Case 2: ragged N (cdiv grid + masked last reduction tile; adj is never
    # padded or copied host-side).
    x2, adj2, w2, b2 = make_problem(k_x2, k_adj2, k_w2, k_b2, 200, 40, 24)
    ref2 = reference(x2, adj2, w2, b2)
    out2 = jax.block_until_ready(graph_convolution(x2, adj2, w2, b2))
    assert out2.shape == (200, 24)
    assert jnp.allclose(out2, ref2, atol=2e-4, rtol=2e-4), float(
        jnp.max(jnp.abs(out2 - ref2)))

    # Case 3: adj already stored in bf16 + bf16 compute (f32 MXU accumulation,
    # bf16 output -> exercises the f32 scratch finalize path).
    out3 = graph_convolution(x.astype(jnp.bfloat16), adj.astype(jnp.bfloat16),
                             w, b, compute_dtype=jnp.bfloat16)
    out3 = jax.block_until_ready(out3).astype(jnp.float32)
    assert jnp.allclose(out3, ref, atol=5e-2, rtol=5e-2), float(
        jnp.max(jnp.abs(out3 - ref)))

    # Case 4: streamed (non-resident) support path with multi-step reduction.
    out4 = jax.block_until_ready(
        graph_convolution(x, adj, w, b, resident_support=False,
                          tile_rows=256, tile_k=256))
    assert jnp.allclose(out4, ref, atol=2e-4, rtol=2e-4), float(
        jnp.max(jnp.abs(out4 - ref)))

    print("KERNEL_OK")
</pallas_src>

<mosaic_0001>
module attributes {stable_mosaic.version = 11 : i64} {
  func.func @_support_kernel(%arg0: i32, %arg1: memref<512x128xf32, #tpu.memory_space<vmem>>, %arg2: memref<128x128xf32, #tpu.memory_space<vmem>>, %arg3: memref<512x128xf32, #tpu.memory_space<vmem>>) attributes {dimension_semantics = [#tpu.dimension_semantics<parallel>], iteration_bounds = array<i64: 1>, scalar_prefetch = 0 : i64, scratch_operands = 0 : i64, tpu.core_type = #tpu.core_type<tc>, window_params = [{transform_indices = @transform_0, window_bounds = array<i64: 512, 128>}, {pipeline_mode = #tpu.pipeline_mode<synchronous>, transform_indices = @transform_1, window_bounds = array<i64: 128, 128>}, {transform_indices = @transform_2, window_bounds = array<i64: 512, 128>}]} {
    %c0 = arith.constant 0 : index
    %c0_0 = arith.constant 0 : index
    %0 = vector.load %arg1[%c0, %c0_0] : memref<512x128xf32, #tpu.memory_space<vmem>>, vector<512x128xf32>
    %c0_1 = arith.constant 0 : index
    %c0_2 = arith.constant 0 : index
    %1 = vector.load %arg2[%c0_1, %c0_2] : memref<128x128xf32, #tpu.memory_space<vmem>>, vector<128x128xf32>
    %cst = arith.constant dense<0.000000e+00> : vector<512x128xf32>
    %2 = tpu.matmul %0, %1, %cst {dimension_numbers = #tpu.dot_dimension_numbers<[1], [0], [0], [1], [0, 0, 1, 1], [], []>} : vector<512x128xf32>, vector<128x128xf32>, vector<512x128xf32> -> vector<512x128xf32>
    %c0_3 = arith.constant 0 : index
    %c0_4 = arith.constant 0 : index
    %3 = vector.load %arg3[%c0_3, %c0_4] : memref<512x128xf32, #tpu.memory_space<vmem>>, vector<512x128xf32>
    tpu.vector_store %arg3[%c0_3, %c0_4], %2 {strides = array<i32>} : memref<512x128xf32, #tpu.memory_space<vmem>>, vector<512x128xf32>,
    return
  }
  func.func @transform_0(%arg0: i32) -> (i32, i32) {
    %c0_i32 = arith.constant 0 : i32
    %c0_i32_0 = arith.constant 0 : i32
    return %arg0, %c0_i32 : i32, i32
  }
  func.func @transform_1(%arg0: i32) -> (i32, i32) {
    %c0_i32 = arith.constant 0 : i32
    %c0_i32_0 = arith.constant 0 : i32
    %c0_i32_1 = arith.constant 0 : i32
    return %c0_i32, %c0_i32_0 : i32, i32
  }
  func.func @transform_2(%arg0: i32) -> (i32, i32) {
    %c0_i32 = arith.constant 0 : i32
    %c0_i32_0 = arith.constant 0 : i32
    return %arg0, %c0_i32 : i32, i32
  }
}

</mosaic_0001>

<llo_original>
// kernel: tpu_custom_call.1
$region0: #{tpu_custom_call.1}
  #allocation0 [shape = 'u32[]', space=smem, size = 0x4, offset = 0x4, fixed_abs, tag = 'smem constant byte address 0x4 - core index']
  #allocation1 [shape = 'u32[144,128]{1,0:T(1,128)}', space=vmem, size = 0x12000, scoped, tag = 'internal scratch']
  %s0 = inlined_call_operand.hbm [shape: f32[512,128], index: 0, kind: input, shape index: {}]
  %s1 = inlined_call_operand.hbm [shape: f32[128,128], index: 1, kind: input, shape index: {}]
  %s2 = inlined_call_operand.hbm [shape: f32[512,128], index: 2, kind: output, shape index: {}]
  %s3 = sld [smem:[#allocation0]]
  $region26: #{tpu_custom_call.1} parent=0
    _
  %s5 = ssub.s32 1, %s3
  %s6 = scalar_select 0, %s5, %s3
  $region1: #{tpu_custom_call.1} parent=0
    #allocation2 [shape = 'u8[262144]{0}', space=vmem, size = 0x40000, scoped, tag = 'input window, operand 0, single buffered']
    #allocation3 [shape = 's32[1]{0}', space=sflag, size = 0x4, scoped, tag = 'scoped memory for tpu_custom_call.1']
    #allocation4 [shape = 's32[1]{0}', space=sflag, size = 0x4, scoped, tag = 'scoped memory for tpu_custom_call.1']
    #allocation5 [shape = 'u8[65536]{0}', space=vmem, size = 0x10000, scoped, tag = 'input window, operand 1, single buffered']
    #allocation6 [shape = 's32[1]{0}', space=sflag, size = 0x4, scoped, tag = 'scoped memory for tpu_custom_call.1']
    #allocation7 [shape = 'u8[262144]{0}', space=vmem, size = 0x40000, scoped, tag = 'output window, operand 0, single buffered']
    %7 = vsyncpa [#allocation3], 0
    %8 = vsyncpa [#allocation6], 0
    %9 = vsyncpa [#allocation4], 0
    // Predicated region
    $region2: #{tpu_custom_call.1} parent=1 // pred_check
      _
    $region3: #{tpu_custom_call.1} parent=1 // pred_check_branch
      %11 = sbr.rel (0) target = $region5
    $region4: #{tpu_custom_call.1} parent=1 // pred_region
      %s13 = ssub.s32 8192, 8192
      %14 = vsyncadd [#allocation3], %s13
      %s15 = sshll.u32 [#allocation2], 4
      %s16 = int_to_ptr.vmem [resolvable:$true] %s15
      %21 = dma.hbm_to_vmem [thread:$0]  %s0, 8192, %s16, [#allocation3], 128, 128, 8
    $region5: #{tpu_custom_call.1} parent=1 // pred_fallthru
      _
    // Predicated region
    $region6: #{tpu_custom_call.1} parent=1 // pred_check
      _
    $region7: #{tpu_custom_call.1} parent=1 // pred_check_branch
      %23 = sbr.rel (0) target = $region9
    $region8: #{tpu_custom_call.1} parent=1 // pred_region
      %s25 = ssub.s32 2048, 2048
      %26 = vsyncadd [#allocation6], %s25
      %s27 = sshll.u32 [#allocation5], 4
      %s28 = int_to_ptr.vmem [resolvable:$true] %s27
      %33 = dma.hbm_to_vmem [thread:$0]  %s1, 2048, %s28, [#allocation6], 128, 128, 8
    $region9: #{tpu_custom_call.1} parent=1 // pred_fallthru
      _
    // Predicated region
    $region10: #{tpu_custom_call.1} parent=1 // pred_check
      _
    $region11: #{tpu_custom_call.1} parent=1 // pred_check_branch
      %35 = sbr.rel (0) target = $region13
    $region12: #{tpu_custom_call.1} parent=1 // pred_region
      %36 = dma.done [#allocation3], 8192
    $region13: #{tpu_custom_call.1} parent=1 // pred_fallthru
      _
    // Predicated region
    $region14: #{tpu_custom_call.1} parent=1 // pred_check
      _
    $region15: #{tpu_custom_call.1} parent=1 // pred_check_branch
      %38 = sbr.rel (0) target = $region17
    $region16: #{tpu_custom_call.1} parent=1 // pred_region
      %39 = dma.done [#allocation6], 2048
    $region17: #{tpu_custom_call.1} parent=1 // pred_fallthru
      _
    %v40 = vld [vmem:[#allocation2] sm:$0xff]
    %v41 = vld [vmem:[#allocation2 + $0x8] sm:$0xff]
    %v42 = vld [vmem:[#allocation2 + $0x10] sm:$0xff]
    %v43 = vld [vmem:[#allocation2 + $0x18] sm:$0xff]
    %v44 = vld [vmem:[#allocation2 + $0x20] sm:$0xff]
    %v45 = vld [vmem:[#allocation2 + $0x28] sm:$0xff]
    %v46 = vld [vmem:[#allocation2 + $0x30] sm:$0xff]
    %v47 = vld [vmem:[#allocation2 + $0x38] sm:$0xff]
    %v48 = vld [vmem:[#allocation2 + $0x40] sm:$0xff]
    %v49 = vld [vmem:[#allocation2 + $0x48] sm:$0xff]
    %v50 = vld [vmem:[#allocation2 + $0x50] sm:$0xff]
    %v51 = vld [vmem:[#allocation2 + $0x58] sm:$0xff]
    %v52 = vld [vmem:[#allocation2 + $0x60] sm:$0xff]
    %v53 = vld [vmem:[#allocation2 + $0x68] sm:$0xff]
    %v54 = vld [vmem:[#allocation2 + $0x70] sm:$0xff]
    %v55 = vld [vmem:[#allocation2 + $0x78] sm:$0xff]
    %v56 = vld [vmem:[#allocation2 + $0x80] sm:$0xff]
    %v57 = vld [vmem:[#allocation2 + $0x88] sm:$0xff]
    %v58 = vld [vmem:[#allocation2 + $0x90] sm:$0xff]
    %v59 = vld [vmem:[#allocation2 + $0x98] sm:$0xff]
    %v60 = vld [vmem:[#allocation2 + $0xa0] sm:$0xff]
    %v61 = vld [vmem:[#allocation2 + $0xa8] sm:$0xff]
    %v62 = vld [vmem:[#allocation2 + $0xb0] sm:$0xff]
    %v63 = vld [vmem:[#allocation2 + $0xb8] sm:$0xff]
    %v64 = vld [vmem:[#allocation2 + $0xc0] sm:$0xff]
    %v65 = vld [vmem:[#allocation2 + $0xc8] sm:$0xff]
    %v66 = vld [vmem:[#allocation2 + $0xd0] sm:$0xff]
    %v67 = vld [vmem:[#allocation2 + $0xd8] sm:$0xff]
    %v68 = vld [vmem:[#allocation2 + $0xe0] sm:$0xff]
    %v69 = vld [vmem:[#allocation2 + $0xe8] sm:$0xff]
    %v70 = vld [vmem:[#allocation2 + $0xf0] sm:$0xff]
    %v71 = vld [vmem:[#allocation2 + $0xf8] sm:$0xff]
    %v72 = vld [vmem:[#allocation2 + $0x100] sm:$0xff]
    %v73 = vld [vmem:[#allocation2 + $0x108] sm:$0xff]
    %v74 = vld [vmem:[#allocation2 + $0x110] sm:$0xff]
    %v75 = vld [vmem:[#allocation2 + $0x118] sm:$0xff]
    %v76 = vld [vmem:[#allocation2 + $0x120] sm:$0xff]
    %v77 = vld [vmem:[#allocation2 + $0x128] sm:$0xff]
    %v78 = vld [vmem:[#allocation2 + $0x130] sm:$0xff]
    %v79 = vld [vmem:[#allocation2 + $0x138] sm:$0xff]
    %v80 = vld [vmem:[#allocation2 + $0x140] sm:$0xff]
    %v81 = vld [vmem:[#allocation2 + $0x148] sm:$0xff]
    %v82 = vld [vmem:[#allocation2 + $0x150] sm:$0xff]
    %v83 = vld [vmem:[#allocation2 + $0x158] sm:$0xff]
    %v84 = vld [vmem:[#allocation2 + $0x160] sm:$0xff]
    %v85 = vld [vmem:[#allocation2 + $0x168] sm:$0xff]
    %v86 = vld [vmem:[#allocation2 + $0x170] sm:$0xff]
    %v87 = vld [vmem:[#allocation2 + $0x178] sm:$0xff]
    %v88 = vld [vmem:[#allocation2 + $0x180] sm:$0xff]
    %v89 = vld [vmem:[#allocation2 + $0x188] sm:$0xff]
    %v90 = vld [vmem:[#allocation2 + $0x190] sm:$0xff]
    %v91 = vld [vmem:[#allocation2 + $0x198] sm:$0xff]
    %v92 = vld [vmem:[#allocation2 + $0x1a0] sm:$0xff]
    %v93 = vld [vmem:[#allocation2 + $0x1a8] sm:$0xff]
    %v94 = vld [vmem:[#allocation2 + $0x1b0] sm:$0xff]
    %v95 = vld [vmem:[#allocation2 + $0x1b8] sm:$0xff]
    %v96 = vld [vmem:[#allocation2 + $0x1c0] sm:$0xff]
    %v97 = vld [vmem:[#allocation2 + $0x1c8] sm:$0xff]
    %v98 = vld [vmem:[#allocation2 + $0x1d0] sm:$0xff]
    %v99 = vld [vmem:[#allocation2 + $0x1d8] sm:$0xff]
    %v100 = vld [vmem:[#allocation2 + $0x1e0] sm:$0xff]
    %v101 = vld [vmem:[#allocation2 + $0x1e8] sm:$0xff]
    %v102 = vld [vmem:[#allocation2 + $0x1f0] sm:$0xff]
    %v103 = vld [vmem:[#allocation2 + $0x1f8] sm:$0xff]
    %v104 = vld [vmem:[#allocation5] sm:$0xff]
    %v105 = vld [vmem:[#allocation5 + $0x8] sm:$0xff]
    %v106 = vld [vmem:[#allocation5 + $0x10] sm:$0xff]
    %v107 = vld [vmem:[#allocation5 + $0x18] sm:$0xff]
    %v108 = vld [vmem:[#allocation5 + $0x20] sm:$0xff]
    %v109 = vld [vmem:[#allocation5 + $0x28] sm:$0xff]
    %v110 = vld [vmem:[#allocation5 + $0x30] sm:$0xff]
    %v111 = vld [vmem:[#allocation5 + $0x38] sm:$0xff]
    %v112 = vld [vmem:[#allocation5 + $0x40] sm:$0xff]
    %v113 = vld [vmem:[#allocation5 + $0x48] sm:$0xff]
    %v114 = vld [vmem:[#allocation5 + $0x50] sm:$0xff]
    %v115 = vld [vmem:[#allocation5 + $0x58] sm:$0xff]
    %v116 = vld [vmem:[#allocation5 + $0x60] sm:$0xff]
    %v117 = vld [vmem:[#allocation5 + $0x68] sm:$0xff]
    %v118 = vld [vmem:[#allocation5 + $0x70] sm:$0xff]
    %v119 = vld [vmem:[#allocation5 + $0x78] sm:$0xff]
    %120 = vmatprep.subr.mxu0 0.0
    %121 = vmatpush1.msra.mxu0 %v119
    %122 = vmatprep.subr.mxu0 0.0
    %123 = vmatpush1.msra.mxu0 %v118
    %124 = vmatprep.subr.mxu0 0.0
    %125 = vmatpush1.msra.mxu0 %v117
    %126 = vmatprep.subr.mxu0 0.0
    %127 = vmatpush1.msra.mxu0 %v116
    %128 = vmatprep.subr.mxu0 0.0
    %129 = vmatpush1.msra.mxu0 %v115
    %130 = vmatprep.subr.mxu0 0.0
    %131 = vmatpush1.msra.mxu0 %v114
    %132 = vmatprep.subr.mxu0 0.0
    %133 = vmatpush1.msra.mxu0 %v113
    %134 = vmatprep.subr.mxu0 0.0
    %135 = vmatpush1.msra.mxu0 %v112
    %136 = vmatprep.subr.mxu0 0.0
    %137 = vmatpush1.msra.mxu0 %v111
    %138 = vmatprep.subr.mxu0 0.0
    %139 = vmatpush1.msra.mxu0 %v110
    %140 = vmatprep.subr.mxu0 0.0
    %141 = vmatpush1.msra.mxu0 %v109
    %142 = vmatprep.subr.mxu0 0.0
    %143 = vmatpush1.msra.mxu0 %v108
    %144 = vmatprep.subr.mxu0 0.0
    %145 = vmatpush1.msra.mxu0 %v107
    %146 = vmatprep.subr.mxu0 0.0
    %147 = vmatpush1.msra.mxu0 %v106
    %148 = vmatprep.subr.mxu0 0.0
    %149 = vmatpush1.msra.mxu0 %v105
    %150 = vmatprep.subr.mxu0 0.0
    %151 = vmatpush1.msra.mxu0 %v104
    %152 = vmatprep.subr.mxu0 0.0
    %153 = vmatpush2.msra.mxu0 0.0
    %154 = vmatprep.subr.mxu0 0.0
    %155 = vmatpush2.msra.mxu0 0.0
    %156 = vmatprep.subr.mxu0 0.0
    %157 = vmatpush2.msra.mxu0 0.0
    %158 = vmatprep.subr.mxu0 0.0
    %159 = vmatpush2.msra.mxu0 0.0
    %160 = vmatprep.subr.mxu0 0.0
    %161 = vmatpush2.msra.mxu0 0.0
    %162 = vmatprep.subr.mxu0 0.0
    %163 = vmatpush2.msra.mxu0 0.0
    %164 = vmatprep.subr.mxu0 0.0
    %165 = vmatpush2.msra.mxu0 0.0
    %166 = vmatprep.subr.mxu0 0.0
    %167 = vmatpush2.msra.mxu0 0.0
    %168 = vmatprep.subr.mxu0 0.0
    %169 = vmatpush2.msra.mxu0 0.0
    %170 = vmatprep.subr.mxu0 0.0
    %171 = vmatpush2.msra.mxu0 0.0
    %172 = vmatprep.subr.mxu0 0.0
    %173 = vmatpush2.msra.mxu0 0.0
    %174 = vmatprep.subr.mxu0 0.0
    %175 = vmatpush2.msra.mxu0 0.0
    %176 = vmatprep.subr.mxu0 0.0
    %177 = vmatpush2.msra.mxu0 0.0
    %178 = vmatprep.subr.mxu0 0.0
    %179 = vmatpush2.msra.mxu0 0.0
    %180 = vmatprep.subr.mxu0 0.0
    %181 = vmatpush2.msra.mxu0 0.0
    %182 = vmatprep.subr.mxu0 0.0
    %183 = vmatpush2.msra.mxu0 0.0
    %184 = vmatprep.mubr.f32.mxu0 0.0
    %185 = vmatmul.mubr.f32.gmra.mxu0 %v40
    %v186 = vpop.f32.mrf.mxu0
    %v187 = vadd.f32 0.0, %v186
    %v188 = vpop.f32.mrf.mxu0
    %189 = vmatprep.mubr.f32.mxu0 0.0
    %190 = vmatmul.mubr.f32.gmra.mxu0 %v41
    %v191 = vpop.f32.mrf.mxu0
    %v192 = vadd.f32 0.0, %v191
    %v193 = vpop.f32.mrf.mxu0
    %194 = vmatprep.mubr.f32.mxu0 0.0
    %195 = vmatmul.mubr.f32.gmra.mxu0 %v42
    %v196 = vpop.f32.mrf.mxu0
    %v197 = vadd.f32 0.0, %v196
    %v198 = vpop.f32.mrf.mxu0
    %199 = vmatprep.mubr.f32.mxu0 0.0
    %200 = vmatmul.mubr.f32.gmra.mxu0 %v43
    %v201 = vpop.f32.mrf.mxu0
    %v202 = vadd.f32 0.0, %v201
    %v203 = vpop.f32.mrf.mxu0
    %204 = vmatprep.mubr.f32.mxu0 0.0
    %205 = vmatmul.mubr.f32.gmra.mxu0 %v44
    %v206 = vpop.f32.mrf.mxu0
    %v207 = vadd.f32 0.0, %v206
    %v208 = vpop.f32.mrf.mxu0
    %209 = vmatprep.mubr.f32.mxu0 0.0
    %210 = vmatmul.mubr.f32.gmra.mxu0 %v45
    %v211 = vpop.f32.mrf.mxu0
    %v212 = vadd.f32 0.0, %v211
    %v213 = vpop.f32.mrf.mxu0
    %214 = vmatprep.mubr.f32.mxu0 0.0
    %215 = vmatmul.mubr.f32.gmra.mxu0 %v46
    %v216 = vpop.f32.mrf.mxu0
    %v217 = vadd.f32 0.0, %v216
    %v218 = vpop.f32.mrf.mxu0
    %219 = vmatprep.mubr.f32.mxu0 0.0
    %220 = vmatmul.mubr.f32.gmra.mxu0 %v47
    %v221 = vpop.f32.mrf.mxu0
    %v222 = vadd.f32 0.0, %v221
    %v223 = vpop.f32.mrf.mxu0
    %224 = vmatprep.mubr.f32.mxu0 0.0
    %225 = vmatmul.mubr.f32.gmra.mxu0 %v48
    %v226 = vpop.f32.mrf.mxu0
    %v227 = vadd.f32 0.0, %v226
    %v228 = vpop.f32.mrf.mxu0
    %229 = vmatprep.mubr.f32.mxu0 0.0
    %230 = vmatmul.mubr.f32.gmra.mxu0 %v49
    %v231 = vpop.f32.mrf.mxu0
    %v232 = vadd.f32 0.0, %v231
    %v233 = vpop.f32.mrf.mxu0
    %234 = vmatprep.mubr.f32.mxu0 0.0
    %235 = vmatmul.mubr.f32.gmra.mxu0 %v50
    %v236 = vpop.f32.mrf.mxu0
    %v237 = vadd.f32 0.0, %v236
    %v238 = vpop.f32.mrf.mxu0
    %239 = vmatprep.mubr.f32.mxu0 0.0
    %240 = vmatmul.mubr.f32.gmra.mxu0 %v51
    %v241 = vpop.f32.mrf.mxu0
    %v242 = vadd.f32 0.0, %v241
    %v243 = vpop.f32.mrf.mxu0
    %244 = vmatprep.mubr.f32.mxu0 0.0
    %245 = vmatmul.mubr.f32.gmra.mxu0 %v52
    %v246 = vpop.f32.mrf.mxu0
    %v247 = vadd.f32 0.0, %v246
    %v248 = vpop.f32.mrf.mxu0
    %249 = vmatprep.mubr.f32.mxu0 0.0
    %250 = vmatmul.mubr.f32.gmra.mxu0 %v53
    %v251 = vpop.f32.mrf.mxu0
    %v252 = vadd.f32 0.0, %v251
    %v253 = vpop.f32.mrf.mxu0
    %254 = vmatprep.mubr.f32.mxu0 0.0
    %255 = vmatmul.mubr.f32.gmra.mxu0 %v54
    %v256 = vpop.f32.mrf.mxu0
    %v257 = vadd.f32 0.0, %v256
    %v258 = vpop.f32.mrf.mxu0
    %259 = vmatprep.mubr.f32.mxu0 0.0
    %260 = vmatmul.mubr.f32.gmra.mxu0 %v55
    %v261 = vpop.f32.mrf.mxu0
    %v262 = vadd.f32 0.0, %v261
    %v263 = vpop.f32.mrf.mxu0
    %264 = vmatprep.mubr.f32.mxu0 0.0
    %265 = vmatmul.mubr.f32.gmra.mxu0 %v56
    %v266 = vpop.f32.mrf.mxu0
    %v267 = vadd.f32 0.0, %v266
    %v268 = vpop.f32.mrf.mxu0
    %269 = vmatprep.mubr.f32.mxu0 0.0
    %270 = vmatmul.mubr.f32.gmra.mxu0 %v57
    %v271 = vpop.f32.mrf.mxu0
    %v272 = vadd.f32 0.0, %v271
    %v273 = vpop.f32.mrf.mxu0
    %274 = vmatprep.mubr.f32.mxu0 0.0
    %275 = vmatmul.mubr.f32.gmra.mxu0 %v58
    %v276 = vpop.f32.mrf.mxu0
    %v277 = vadd.f32 0.0, %v276
    %v278 = vpop.f32.mrf.mxu0
    %279 = vmatprep.mubr.f32.mxu0 0.0
    %280 = vmatmul.mubr.f32.gmra.mxu0 %v59
    %v281 = vpop.f32.mrf.mxu0
    %v282 = vadd.f32 0.0, %v281
    %v283 = vpop.f32.mrf.mxu0
    %284 = vmatprep.mubr.f32.mxu0 0.0
    %285 = vmatmul.mubr.f32.gmra.mxu0 %v60
    %v286 = vpop.f32.mrf.mxu0
    %v287 = vadd.f32 0.0, %v286
    %v288 = vpop.f32.mrf.mxu0
    %289 = vmatprep.mubr.f32.mxu0 0.0
    %290 = vmatmul.mubr.f32.gmra.mxu0 %v61
    %v291 = vpop.f32.mrf.mxu0
    %v292 = vadd.f32 0.0, %v291
    %v293 = vpop.f32.mrf.mxu0
    %294 = vmatprep.mubr.f32.mxu0 0.0
    %295 = vmatmul.mubr.f32.gmra.mxu0 %v62
    %v296 = vpop.f32.mrf.mxu0
    %v297 = vadd.f32 0.0, %v296
    %v298 = vpop.f32.mrf.mxu0
    %299 = vmatprep.mubr.f32.mxu0 0.0
    %300 = vmatmul.mubr.f32.gmra.mxu0 %v63
    %v301 = vpop.f32.mrf.mxu0
    %v302 = vadd.f32 0.0, %v301
    %v303 = vpop.f32.mrf.mxu0
    %304 = vmatprep.mubr.f32.mxu0 0.0
    %305 = vmatmul.mubr.f32.gmra.mxu0 %v64
    %v306 = vpop.f32.mrf.mxu0
    %v307 = vadd.f32 0.0, %v306
    %v308 = vpop.f32.mrf.mxu0
    %309 = vmatprep.mubr.f32.mxu0 0.0
    %310 = vmatmul.mubr.f32.gmra.mxu0 %v65
    %v311 = vpop.f32.mrf.mxu0
    %v312 = vadd.f32 0.0, %v311
    %v313 = vpop.f32.mrf.mxu0
    %314 = vmatprep.mubr.f32.mxu0 0.0
    %315 = vmatmul.mubr.f32.gmra.mxu0 %v66
    %v316 = vpop.f32.mrf.mxu0
    %v317 = vadd.f32 0.0, %v316
    %v318 = vpop.f32.mrf.mxu0
    %319 = vmatprep.mubr.f32.mxu0 0.0
    %320 = vmatmul.mubr.f32.gmra.mxu0 %v67
    %v321 = vpop.f32.mrf.mxu0
    %v322 = vadd.f32 0.0, %v321
    %v323 = vpop.f32.mrf.mxu0
    %324 = vmatprep.mubr.f32.mxu0 0.0
    %325 = vmatmul.mubr.f32.gmra.mxu0 %v68
    %v326 = vpop.f32.mrf.mxu0
    %v327 = vadd.f32 0.0, %v326
    %v328 = vpop.f32.mrf.mxu0
    %329 = vmatprep.mubr.f32.mxu0 0.0
    %330 = vmatmul.mubr.f32.gmra.mxu0 %v69
    %v331 = vpop.f32.mrf.mxu0
    %v332 = vadd.f32 0.0, %v331
    %v333 = vpop.f32.mrf.mxu0
    %334 = vmatprep.mubr.f32.mxu0 0.0
    %335 = vmatmul.mubr.f32.gmra.mxu0 %v70
    %v336 = vpop.f32.mrf.mxu0
    %v337 = vadd.f32 0.0, %v336
    %v338 = vpop.f32.mrf.mxu0
    %339 = vmatprep.mubr.f32.mxu0 0.0
    %340 = vmatmul.mubr.f32.gmra.mxu0 %v71
    %v341 = vpop.f32.mrf.mxu0
    %v342 = vadd.f32 0.0, %v341
    %v343 = vpop.f32.mrf.mxu0
    %344 = vmatprep.mubr.f32.mxu0 0.0
    %345 = vmatmul.mubr.f32.gmra.mxu0 %v72
    %v346 = vpop.f32.mrf.mxu0
    %v347 = vadd.f32 0.0, %v346
    %v348 = vpop.f32.mrf.mxu0
    %349 = vmatprep.mubr.f32.mxu0 0.0
    %350 = vmatmul.mubr.f32.gmra.mxu0 %v73
    %v351 = vpop.f32.mrf.mxu0
    %v352 = vadd.f32 0.0, %v351
    %v353 = vpop.f32.mrf.mxu0
    %354 = vmatprep.mubr.f32.mxu0 0.0
    %355 = vmatmul.mubr.f32.gmra.mxu0 %v74
    %v356 = vpop.f32.mrf.mxu0
    %v357 = vadd.f32 0.0, %v356
    %v358 = vpop.f32.mrf.mxu0
    %359 = vmatprep.mubr.f32.mxu0 0.0
    %360 = vmatmul.mubr.f32.gmra.mxu0 %v75
    %v361 = vpop.f32.mrf.mxu0
    %v362 = vadd.f32 0.0, %v361
    %v363 = vpop.f32.mrf.mxu0
    %364 = vmatprep.mubr.f32.mxu0 0.0
    %365 = vmatmul.mubr.f32.gmra.mxu0 %v76
    %v366 = vpop.f32.mrf.mxu0
    %v367 = vadd.f32 0.0, %v366
    %v368 = vpop.f32.mrf.mxu0
    %369 = vmatprep.mubr.f32.mxu0 0.0
    %370 = vmatmul.mubr.f32.gmra.mxu0 %v77
    %v371 = vpop.f32.mrf.mxu0
    %v372 = vadd.f32 0.0, %v371
    %v373 = vpop.f32.mrf.mxu0
    %374 = vmatprep.mubr.f32.mxu0 0.0
    %375 = vmatmul.mubr.f32.gmra.mxu0 %v78
    %v376 = vpop.f32.mrf.mxu0
    %v377 = vadd.f32 0.0, %v376
    %v378 = vpop.f32.mrf.mxu0
    %379 = vmatprep.mubr.f32.mxu0 0.0
    %380 = vmatmul.mubr.f32.gmra.mxu0 %v79
    %v381 = vpop.f32.mrf.mxu0
    %v382 = vadd.f32 0.0, %v381
    %v383 = vpop.f32.mrf.mxu0
    %384 = vmatprep.mubr.f32.mxu0 0.0
    %385 = vmatmul.mubr.f32.gmra.mxu0 %v80
    %v386 = vpop.f32.mrf.mxu0
    %v387 = vadd.f32 0.0, %v386
    %v388 = vpop.f32.mrf.mxu0
    %389 = vmatprep.mubr.f32.mxu0 0.0
    %390 = vmatmul.mubr.f32.gmra.mxu0 %v81
    %v391 = vpop.f32.mrf.mxu0
    %v392 = vadd.f32 0.0, %v391
    %v393 = vpop.f32.mrf.mxu0
    %394 = vmatprep.mubr.f32.mxu0 0.0
    %395 = vmatmul.mubr.f32.gmra.mxu0 %v82
    %v396 = vpop.f32.mrf.mxu0
    %v397 = vadd.f32 0.0, %v396
    %v398 = vpop.f32.mrf.mxu0
    %399 = vmatprep.mubr.f32.mxu0 0.0
    %400 = vmatmul.mubr.f32.gmra.mxu0 %v83
    %v401 = vpop.f32.mrf.mxu0
    %v402 = vadd.f32 0.0, %v401
    %v403 = vpop.f32.mrf.mxu0
    %404 = vmatprep.mubr.f32.mxu0 0.0
    %405 = vmatmul.mubr.f32.gmra.mxu0 %v84
    %v406 = vpop.f32.mrf.mxu0
    %v407 = vadd.f32 0.0, %v406
    %v408 = vpop.f32.mrf.mxu0
    %409 = vmatprep.mubr.f32.mxu0 0.0
    %410 = vmatmul.mubr.f32.gmra.mxu0 %v85
    %v411 = vpop.f32.mrf.mxu0
    %v412 = vadd.f32 0.0, %v411
    %v413 = vpop.f32.mrf.mxu0
    %414 = vmatprep.mubr.f32.mxu0 0.0
    %415 = vmatmul.mubr.f32.gmra.mxu0 %v86
    %v416 = vpop.f32.mrf.mxu0
    %v417 = vadd.f32 0.0, %v416
    %v418 = vpop.f32.mrf.mxu0
    %419 = vmatprep.mubr.f32.mxu0 0.0
    %420 = vmatmul.mubr.f32.gmra.mxu0 %v87
    %v421 = vpop.f32.mrf.mxu0
    %v422 = vadd.f32 0.0, %v421
    %v423 = vpop.f32.mrf.mxu0
    %424 = vmatprep.mubr.f32.mxu0 0.0
    %425 = vmatmul.mubr.f32.gmra.mxu0 %v88
    %v426 = vpop.f32.mrf.mxu0
    %v427 = vadd.f32 0.0, %v426
    %v428 = vpop.f32.mrf.mxu0
    %429 = vmatprep.mubr.f32.mxu0 0.0
    %430 = vmatmul.mubr.f32.gmra.mxu0 %v89
    %v431 = vpop.f32.mrf.mxu0
    %v432 = vadd.f32 0.0, %v431
    %v433 = vpop.f32.mrf.mxu0
    %434 = vmatprep.mubr.f32.mxu0 0.0
    %435 = vmatmul.mubr.f32.gmra.mxu0 %v90
    %v436 = vpop.f32.mrf.mxu0
    %v437 = vadd.f32 0.0, %v436
    %v438 = vpop.f32.mrf.mxu0
    %439 = vmatprep.mubr.f32.mxu0 0.0
    %440 = vmatmul.mubr.f32.gmra.mxu0 %v91
    %v441 = vpop.f32.mrf.mxu0
    %v442 = vadd.f32 0.0, %v441
    %v443 = vpop.f32.mrf.mxu0
    %444 = vmatprep.mubr.f32.mxu0 0.0
    %445 = vmatmul.mubr.f32.gmra.mxu0 %v92
    %v446 = vpop.f32.mrf.mxu0
    %v447 = vadd.f32 0.0, %v446
    %v448 = vpop.f32.mrf.mxu0
    %449 = vmatprep.mubr.f32.mxu0 0.0
    %450 = vmatmul.mubr.f32.gmra.mxu0 %v93
    %v451 = vpop.f32.mrf.mxu0
    %v452 = vadd.f32 0.0, %v451
    %v453 = vpop.f32.mrf.mxu0
    %454 = vmatprep.mubr.f32.mxu0 0.0
    %455 = vmatmul.mubr.f32.gmra.mxu0 %v94
    %v456 = vpop.f32.mrf.mxu0
    %v457 = vadd.f32 0.0, %v456
    %v458 = vpop.f32.mrf.mxu0
    %459 = vmatprep.mubr.f32.mxu0 0.0
    %460 = vmatmul.mubr.f32.gmra.mxu0 %v95
    %v461 = vpop.f32.mrf.mxu0
    %v462 = vadd.f32 0.0, %v461
    %v463 = vpop.f32.mrf.mxu0
    %464 = vmatprep.mubr.f32.mxu0 0.0
    %465 = vmatmul.mubr.f32.gmra.mxu0 %v96
    %v466 = vpop.f32.mrf.mxu0
    %v467 = vadd.f32 0.0, %v466
    %v468 = vpop.f32.mrf.mxu0
    %469 = vmatprep.mubr.f32.mxu0 0.0
    %470 = vmatmul.mubr.f32.gmra.mxu0 %v97
    %v471 = vpop.f32.mrf.mxu0
    %v472 = vadd.f32 0.0, %v471
    %v473 = vpop.f32.mrf.mxu0
    %474 = vmatprep.mubr.f32.mxu0 0.0
    %475 = vmatmul.mubr.f32.gmra.mxu0 %v98
    %v476 = vpop.f32.mrf.mxu0
    %v477 = vadd.f32 0.0, %v476
    %v478 = vpop.f32.mrf.mxu0
    %479 = vmatprep.mubr.f32.mxu0 0.0
    %480 = vmatmul.mubr.f32.gmra.mxu0 %v99
    %v481 = vpop.f32.mrf.mxu0
    %v482 = vadd.f32 0.0, %v481
    %v483 = vpop.f32.mrf.mxu0
    %484 = vmatprep.mubr.f32.mxu0 0.0
    %485 = vmatmul.mubr.f32.gmra.mxu0 %v100
    %v486 = vpop.f32.mrf.mxu0
    %v487 = vadd.f32 0.0, %v486
    %v488 = vpop.f32.mrf.mxu0
    %489 = vmatprep.mubr.f32.mxu0 0.0
    %490 = vmatmul.mubr.f32.gmra.mxu0 %v101
    %v491 = vpop.f32.mrf.mxu0
    %v492 = vadd.f32 0.0, %v491
    %v493 = vpop.f32.mrf.mxu0
    %494 = vmatprep.mubr.f32.mxu0 0.0
    %495 = vmatmul.mubr.f32.gmra.mxu0 %v102
    %v496 = vpop.f32.mrf.mxu0
    %v497 = vadd.f32 0.0, %v496
    %v498 = vpop.f32.mrf.mxu0
    %499 = vmatprep.mubr.f32.mxu0 0.0
    %500 = vmatmul.mubr.f32.gmra.mxu0 %v103
    %v501 = vpop.f32.mrf.mxu0
    %v502 = vadd.f32 0.0, %v501
    %v503 = vpop.f32.mrf.mxu0
    %504 = vdwg.mxu0
    %505 = vst [vmem:[#allocation7] sm:$0xff] %v187
    %506 = vst [vmem:[#allocation7 + $0x8] sm:$0xff] %v192
    %507 = vst [vmem:[#allocation7 + $0x10] sm:$0xff] %v197
    %508 = vst [vmem:[#allocation7 + $0x18] sm:$0xff] %v202
    %509 = vst [vmem:[#allocation7 + $0x20] sm:$0xff] %v207
    %510 = vst [vmem:[#allocation7 + $0x28] sm:$0xff] %v212
    %511 = vst [vmem:[#allocation7 + $0x30] sm:$0xff] %v217
    %512 = vst [vmem:[#allocation7 + $0x38] sm:$0xff] %v222
    %513 = vst [vmem:[#allocation7 + $0x40] sm:$0xff] %v227
    %514 = vst [vmem:[#allocation7 + $0x48] sm:$0xff] %v232
    %515 = vst [vmem:[#allocation7 + $0x50] sm:$0xff] %v237
    %516 = vst [vmem:[#allocation7 + $0x58] sm:$0xff] %v242
    %517 = vst [vmem:[#allocation7 + $0x60] sm:$0xff] %v247
    %518 = vst [vmem:[#allocation7 + $0x68] sm:$0xff] %v252
    %519 = vst [vmem:[#allocation7 + $0x70] sm:$0xff] %v257
    %520 = vst [vmem:[#allocation7 + $0x78] sm:$0xff] %v262
    %521 = vst [vmem:[#allocation7 + $0x80] sm:$0xff] %v267
    %522 = vst [vmem:[#allocation7 + $0x88] sm:$0xff] %v272
    %523 = vst [vmem:[#allocation7 + $0x90] sm:$0xff] %v277
    %524 = vst [vmem:[#allocation7 + $0x98] sm:$0xff] %v282
    %525 = vst [vmem:[#allocation7 + $0xa0] sm:$0xff] %v287
    %526 = vst [vmem:[#allocation7 + $0xa8] sm:$0xff] %v292
    %527 = vst [vmem:[#allocation7 + $0xb0] sm:$0xff] %v297
    %528 = vst [vmem:[#allocation7 + $0xb8] sm:$0xff] %v302
    %529 = vst [vmem:[#allocation7 + $0xc0] sm:$0xff] %v307
    %530 = vst [vmem:[#allocation7 + $0xc8] sm:$0xff] %v312
    %531 = vst [vmem:[#allocation7 + $0xd0] sm:$0xff] %v317
    %532 = vst [vmem:[#allocation7 + $0xd8] sm:$0xff] %v322
    %533 = vst [vmem:[#allocation7 + $0xe0] sm:$0xff] %v327
    %534 = vst [vmem:[#allocation7 + $0xe8] sm:$0xff] %v332
    %535 = vst [vmem:[#allocation7 + $0xf0] sm:$0xff] %v337
    %536 = vst [vmem:[#allocation7 + $0xf8] sm:$0xff] %v342
    %537 = vst [vmem:[#allocation7 + $0x100] sm:$0xff] %v347
    %538 = vst [vmem:[#allocation7 + $0x108] sm:$0xff] %v352
    %539 = vst [vmem:[#allocation7 + $0x110] sm:$0xff] %v357
    %540 = vst [vmem:[#allocation7 + $0x118] sm:$0xff] %v362
    %541 = vst [vmem:[#allocation7 + $0x120] sm:$0xff] %v367
    %542 = vst [vmem:[#allocation7 + $0x128] sm:$0xff] %v372
    %543 = vst [vmem:[#allocation7 + $0x130] sm:$0xff] %v377
    %544 = vst [vmem:[#allocation7 + $0x138] sm:$0xff] %v382
    %545 = vst [vmem:[#allocation7 + $0x140] sm:$0xff] %v387
    %546 = vst [vmem:[#allocation7 + $0x148] sm:$0xff] %v392
    %547 = vst [vmem:[#allocation7 + $0x150] sm:$0xff] %v397
    %548 = vst [vmem:[#allocation7 + $0x158] sm:$0xff] %v402
    %549 = vst [vmem:[#allocation7 + $0x160] sm:$0xff] %v407
    %550 = vst [vmem:[#allocation7 + $0x168] sm:$0xff] %v412
    %551 = vst [vmem:[#allocation7 + $0x170] sm:$0xff] %v417
    %552 = vst [vmem:[#allocation7 + $0x178] sm:$0xff] %v422
    %553 = vst [vmem:[#allocation7 + $0x180] sm:$0xff] %v427
    %554 = vst [vmem:[#allocation7 + $0x188] sm:$0xff] %v432
    %555 = vst [vmem:[#allocation7 + $0x190] sm:$0xff] %v437
    %556 = vst [vmem:[#allocation7 + $0x198] sm:$0xff] %v442
    %557 = vst [vmem:[#allocation7 + $0x1a0] sm:$0xff] %v447
    %558 = vst [vmem:[#allocation7 + $0x1a8] sm:$0xff] %v452
    %559 = vst [vmem:[#allocation7 + $0x1b0] sm:$0xff] %v457
    %560 = vst [vmem:[#allocation7 + $0x1b8] sm:$0xff] %v462
    %561 = vst [vmem:[#allocation7 + $0x1c0] sm:$0xff] %v467
    %562 = vst [vmem:[#allocation7 + $0x1c8] sm:$0xff] %v472
    %563 = vst [vmem:[#allocation7 + $0x1d0] sm:$0xff] %v477
    %564 = vst [vmem:[#allocation7 + $0x1d8] sm:$0xff] %v482
    %565 = vst [vmem:[#allocation7 + $0x1e0] sm:$0xff] %v487
    %566 = vst [vmem:[#allocation7 + $0x1e8] sm:$0xff] %v492
    %567 = vst [vmem:[#allocation7 + $0x1f0] sm:$0xff] %v497
    %568 = vst [vmem:[#allocation7 + $0x1f8] sm:$0xff] %v502
    // Predicated region
    $region18: #{tpu_custom_call.1} parent=1 // pred_check
      _
    $region19: #{tpu_custom_call.1} parent=1 // pred_check_branch
      %570 = sbr.rel (0) target = $region21
    $region20: #{tpu_custom_call.1} parent=1 // pred_region
      %s572 = ssub.s32 8192, 8192
      %573 = vsyncadd [#allocation4], %s572
      %s574 = sshll.u32 [#allocation7], 4
      %s575 = int_to_ptr.vmem [resolvable:$true] %s574
      %580 = dma.vmem_to_hbm [thread:$0]  %s575, 8192, %s2, [#allocation4], 128, 128, 8
    $region21: #{tpu_custom_call.1} parent=1 // pred_fallthru
      _
    // Predicated region
    $region22: #{tpu_custom_call.1} parent=1 // pred_check
      _
    $region23: #{tpu_custom_call.1} parent=1 // pred_check_branch
      %582 = sbr.rel (0) target = $region25
    $region24: #{tpu_custom_call.1} parent=1 // pred_region
      %583 = dma.done [#allocation4], 8192
    $region25: #{tpu_custom_call.1} parent=1 // pred_fallthru
      _
    %584 = vsyncpa [#allocation3], 1
    %585 = vsyncpa [#allocation6], 1
    %586 = vsyncpa [#allocation4], 1

</llo_original>
